<compile_context>
chip_gen: v6e
topology: v6e:2x2x1
jax: 0.10.0
libtpu: 0.0.40
codegen_flags: <defaults>
</compile_context>

<pallas_src>
import jax
import jax.numpy as jnp
from jax.experimental import pallas as pl
from jax.experimental.pallas import tpu as pltpu

EPS = 1e-5      # PyTorch BatchNorm1d default eps
LANE = 128
TB_GRAN = 16    # batch-tile granularity (bf16 sublane packing)


def _round_up(n, m):
    return ((n + m - 1) // m) * m


def _cdiv(a, b):
    return (a + b - 1) // b


# ----------------------------------------------------------------------------
# Kernel: one batch tile per grid step.
#   x tile (TILE_B, Din) f32 (cast to bf16 in-kernel), weights bf16 [in, out]
#   (BN pre-folded), biases f32 [1, out], output bf16 (TILE_B, Dout_p).
# ----------------------------------------------------------------------------
def ffnn_kernel(x_ref, w1_ref, b1_ref, w2_ref, b2_ref, w3_ref, b3_ref, o_ref):
    x = x_ref[...].astype(jnp.bfloat16)                               # per-tile cast (VPU, hidden under DMA)

    h = jnp.dot(x, w1_ref[...], preferred_element_type=jnp.float32)   # MXU, f32 acc
    h = jnp.maximum(h + b1_ref[...], 0.0)                             # folded BN + ReLU (f32)
    # dropout (eval mode) = identity

    h = jnp.dot(h.astype(jnp.bfloat16), w2_ref[...],
                preferred_element_type=jnp.float32)
    h = jnp.maximum(h + b2_ref[...], 0.0)
    # dropout2 (eval mode) = identity

    out = jnp.dot(h.astype(jnp.bfloat16), w3_ref[...],
                  preferred_element_type=jnp.float32) + b3_ref[...]
    o_ref[...] = out.astype(o_ref.dtype)                              # bf16 store: half the writeback


# ----------------------------------------------------------------------------
# One-time parameter preparation: BN fold, transpose, pad hidden/output dims to
# lane multiples, cast weights to bf16.  Call once; reuse for every forward.
# ----------------------------------------------------------------------------
def prepare_params(params):
    f32 = jnp.float32
    w1, b1 = params["w1"].astype(f32), params["b1"].astype(f32)
    w2, b2 = params["w2"].astype(f32), params["b2"].astype(f32)
    w3, b3 = params["w3"].astype(f32), params["b3"].astype(f32)

    s1 = params["gamma1"].astype(f32) * jax.lax.rsqrt(params["var1"].astype(f32) + EPS)
    s2 = params["gamma2"].astype(f32) * jax.lax.rsqrt(params["var2"].astype(f32) + EPS)

    # Fold eval-mode BN into the Linear:
    #   (xW^T + b - m)*s + beta == x(W^T*s) + ((b - m)*s + beta)
    w1t = w1.T * s1[None, :]
    b1f = (b1 - params["mean1"].astype(f32)) * s1 + params["beta1"].astype(f32)
    w2t = w2.T * s2[None, :]
    b2f = (b2 - params["mean2"].astype(f32)) * s2 + params["beta2"].astype(f32)
    w3t = w3.T
    b3f = b3

    d_in, h1 = w1t.shape
    _, h2 = w2t.shape
    _, d_out = w3t.shape
    h1_p = _round_up(h1, LANE)
    h2_p = _round_up(h2, LANE)
    d_out_p = _round_up(d_out, LANE)

    def pad2(a, rows, cols):
        return jnp.pad(a, ((0, rows - a.shape[0]), (0, cols - a.shape[1])))

    def padrow(v, cols):
        return jnp.pad(v, (0, cols - v.shape[0])).reshape(1, -1).astype(f32)

    return {
        # w1 first dim stays d_in (no input-feature padding needed: the x block
        # spans the full feature extent, and Mosaic handles a non-128 K).
        "w1": pad2(w1t, d_in, h1_p).astype(jnp.bfloat16),
        "b1": padrow(b1f, h1_p),
        "w2": pad2(w2t, h1_p, h2_p).astype(jnp.bfloat16),
        "b2": padrow(b2f, h2_p),
        "w3": pad2(w3t, h2_p, d_out_p).astype(jnp.bfloat16),
        "b3": padrow(b3f, d_out_p),
        "dims": (d_in, d_out, h1_p, h2_p, d_out_p),
    }


# ----------------------------------------------------------------------------
# Forward pass: batch-tiled pallas_call.
# ----------------------------------------------------------------------------
def ffnn_forward(x, prep, tile_b=2048, vmem_cap_bytes=32 << 20):
    B, d_in = x.shape
    d_in0, d_out0, h1_p, h2_p, d_out_p = prep["dims"]
    assert d_in == d_in0, "input feature size mismatch"

    # Tile count first (>=2 when possible so the 'parallel' axis can shard
    # across v7x's two TensorCores), then a *balanced* tile size so batch
    # padding stays under one 16-row granule per tile.
    n_tiles = max(1, _cdiv(B, tile_b))
    if n_tiles == 1 and B >= 2 * TB_GRAN:
        n_tiles = 2
    tb = _round_up(_cdiv(B, n_tiles), TB_GRAN)
    b_pad = tb * n_tiles

    # x stays f32 and unpadded in the feature dim; only pad the batch if needed.
    xp = x if b_pad == B else jnp.pad(x, ((0, b_pad - B), (0, 0)))

    batch_map = lambda i: (i, 0)   # x / out tiles walk the batch axis
    const_map = lambda i: (0, 0)   # weights & biases stay resident

    in_specs = [
        pl.BlockSpec((tb, d_in), batch_map),
        pl.BlockSpec((d_in, h1_p), const_map),
        pl.BlockSpec((1, h1_p), const_map),
        pl.BlockSpec((h1_p, h2_p), const_map),
        pl.BlockSpec((1, h2_p), const_map),
        pl.BlockSpec((h2_p, d_out_p), const_map),
        pl.BlockSpec((1, d_out_p), const_map),
    ]
    out_spec = pl.BlockSpec((tb, d_out_p), batch_map)

    # Accurate VMEM budget: resident (double-buffered by default) weights +
    # double-buffered f32 x tiles + double-buffered bf16 out tiles + f32
    # intermediates, with 50% headroom.  Capped at 32 MiB (safe on v7x's 64 MiB
    # VMEM); raise vmem_cap_bytes on v5e/v6e (128 MiB) for very large tiles.
    weight_bytes = 2 * (d_in * h1_p + h1_p * h2_p + h2_p * d_out_p) \
        + 4 * (h1_p + h2_p + d_out_p)
    stream_bytes = 2 * tb * d_in * 4 + 2 * tb * d_out_p * 2
    interm_bytes = 4 * tb * (h1_p + h2_p + d_out_p)
    need = 2 * weight_bytes + stream_bytes + interm_bytes
    vmem_limit = int(min(vmem_cap_bytes, max(4 << 20, (3 * need) // 2)))

    out = pl.pallas_call(
        ffnn_kernel,
        out_shape=jax.ShapeDtypeStruct((b_pad, d_out_p), jnp.bfloat16),
        grid=(n_tiles,),
        in_specs=in_specs,
        out_specs=out_spec,
        compiler_params=pltpu.CompilerParams(
            dimension_semantics=("parallel",),   # megacore sharding on v7x
            vmem_limit_bytes=vmem_limit,
        ),
    )(xp, prep["w1"], prep["b1"], prep["w2"], prep["b2"], prep["w3"], prep["b3"])

    # Slice off padded rows / columns; upcast (touches only (B, d_out) data).
    return out[:B, :d_out0].astype(jnp.float32)


# ----------------------------------------------------------------------------
# Parameter init (PyTorch-like) and pure-JAX f32 reference.
# ----------------------------------------------------------------------------
def init_params(key, input_size, hidden_size, hidden_size2, output_size):
    ks = jax.random.split(key, 6)

    def linear(kw, kb, fan_in, fan_out):
        bound = 1.0 / jnp.sqrt(fan_in)
        w = jax.random.uniform(kw, (fan_out, fan_in), jnp.float32, -bound, bound)
        b = jax.random.uniform(kb, (fan_out,), jnp.float32, -bound, bound)
        return w, b

    w1, b1 = linear(ks[0], ks[1], input_size, hidden_size)
    w2, b2 = linear(ks[2], ks[3], hidden_size, hidden_size2)
    w3, b3 = linear(ks[4], ks[5], hidden_size2, output_size)

    k7, k8, k9, k10 = jax.random.split(jax.random.fold_in(key, 7), 4)
    return {
        "w1": w1, "b1": b1,
        "gamma1": jnp.ones((hidden_size,), jnp.float32),
        "beta1": jnp.zeros((hidden_size,), jnp.float32),
        "mean1": 0.1 * jax.random.normal(k7, (hidden_size,), jnp.float32),
        "var1": 1.0 + 0.1 * jax.random.uniform(k8, (hidden_size,), jnp.float32),
        "w2": w2, "b2": b2,
        "gamma2": jnp.ones((hidden_size2,), jnp.float32),
        "beta2": jnp.zeros((hidden_size2,), jnp.float32),
        "mean2": 0.1 * jax.random.normal(k9, (hidden_size2,), jnp.float32),
        "var2": 1.0 + 0.1 * jax.random.uniform(k10, (hidden_size2,), jnp.float32),
        "w3": w3, "b3": b3,
    }


def ffnn_reference(x, p):
    """Pure-JAX f32 reference (eval-mode PyTorch semantics)."""
    h = x @ p["w1"].T + p["b1"]
    h = (h - p["mean1"]) / jnp.sqrt(p["var1"] + EPS) * p["gamma1"] + p["beta1"]
    h = jnp.maximum(h, 0.0)
    h = h @ p["w2"].T + p["b2"]
    h = (h - p["mean2"]) / jnp.sqrt(p["var2"] + EPS) * p["gamma2"] + p["beta2"]
    h = jnp.maximum(h, 0.0)
    return h @ p["w3"].T + p["b3"]


if __name__ == "__main__":
    key = jax.random.PRNGKey(0)
    # Small, odd-ish shapes to exercise batch tiling + padding:
    #   batch 20 with tile_b=16 -> 2 balanced tiles of 16 (pads to 32),
    #   input 120 (kept unpadded, K=120), hidden2 64 -> 128, output 8 -> 128
    #   (both sliced back in the wrapper).
    batch = 20
    input_size, hidden_size, hidden_size2, output_size = 120, 128, 64, 8

    kx, kp = jax.random.split(key)
    x = jax.random.normal(kx, (batch, input_size), jnp.float32)
    params = init_params(kp, input_size, hidden_size, hidden_size2, output_size)

    prep = prepare_params(params)            # one-time BN fold / transpose / pad / bf16 cast
    out = ffnn_forward(x, prep, tile_b=16)   # grid = 2 batch tiles
    out = jax.block_until_ready(out)

    ref = ffnn_reference(x, params)
    assert out.shape == (batch, output_size)
    # bf16 matmuls + bf16 output with f32 accumulation -> loosened tolerance.
    assert jnp.allclose(out, ref, atol=5e-2, rtol=5e-2), "mismatch vs reference"

    print("KERNEL_OK")
</pallas_src>

<mosaic_0001>
module attributes {stable_mosaic.version = 11 : i64} {
  func.func @ffnn_kernel(%arg0: i32, %arg1: memref<16x120xf32, #tpu.memory_space<vmem>>, %arg2: memref<120x128xbf16, #tpu.memory_space<vmem>>, %arg3: memref<1x128xf32, #tpu.memory_space<vmem>>, %arg4: memref<128x128xbf16, #tpu.memory_space<vmem>>, %arg5: memref<1x128xf32, #tpu.memory_space<vmem>>, %arg6: memref<128x128xbf16, #tpu.memory_space<vmem>>, %arg7: memref<1x128xf32, #tpu.memory_space<vmem>>, %arg8: memref<16x128xbf16, #tpu.memory_space<vmem>>) attributes {dimension_semantics = [#tpu.dimension_semantics<parallel>], iteration_bounds = array<i64: 2>, scalar_prefetch = 0 : i64, scratch_operands = 0 : i64, tpu.core_type = #tpu.core_type<tc>, window_params = [{transform_indices = @transform_0, window_bounds = array<i64: 16, 120>}, {pipeline_mode = #tpu.pipeline_mode<synchronous>, transform_indices = @transform_1, window_bounds = array<i64: 120, 128>}, {pipeline_mode = #tpu.pipeline_mode<synchronous>, transform_indices = @transform_2, window_bounds = array<i64: 1, 128>}, {pipeline_mode = #tpu.pipeline_mode<synchronous>, transform_indices = @transform_3, window_bounds = array<i64: 128, 128>}, {pipeline_mode = #tpu.pipeline_mode<synchronous>, transform_indices = @transform_4, window_bounds = array<i64: 1, 128>}, {pipeline_mode = #tpu.pipeline_mode<synchronous>, transform_indices = @transform_5, window_bounds = array<i64: 128, 128>}, {pipeline_mode = #tpu.pipeline_mode<synchronous>, transform_indices = @transform_6, window_bounds = array<i64: 1, 128>}, {transform_indices = @transform_7, window_bounds = array<i64: 16, 128>}]} {
    %c0 = arith.constant 0 : index
    %c0_0 = arith.constant 0 : index
    %0 = vector.load %arg1[%c0, %c0_0] : memref<16x120xf32, #tpu.memory_space<vmem>>, vector<16x120xf32>
    %1 = arith.truncf %0 : vector<16x120xf32> to vector<16x120xbf16>
    %c0_1 = arith.constant 0 : index
    %c0_2 = arith.constant 0 : index
    %2 = vector.load %arg2[%c0_1, %c0_2] : memref<120x128xbf16, #tpu.memory_space<vmem>>, vector<120x128xbf16>
    %cst = arith.constant dense<0.000000e+00> : vector<16x128xf32>
    %3 = tpu.matmul %1, %2, %cst {dimension_numbers = #tpu.dot_dimension_numbers<[1], [0], [0], [1], [0, 0, 1, 1], [], []>} : vector<16x120xbf16>, vector<120x128xbf16>, vector<16x128xf32> -> vector<16x128xf32>
    %c0_3 = arith.constant 0 : index
    %c0_4 = arith.constant 0 : index
    %4 = vector.load %arg3[%c0_3, %c0_4] : memref<1x128xf32, #tpu.memory_space<vmem>>, vector<1x128xf32>
    %5 = vector.broadcast %4 : vector<1x128xf32> to vector<16x128xf32>
    %6 = arith.addf %3, %5 : vector<16x128xf32>
    %cst_5 = arith.constant 0.000000e+00 : f32
    %7 = vector.broadcast %cst_5 : f32 to vector<16x128xf32>
    %8 = arith.maximumf %6, %7 : vector<16x128xf32>
    %9 = arith.truncf %8 : vector<16x128xf32> to vector<16x128xbf16>
    %c0_6 = arith.constant 0 : index
    %c0_7 = arith.constant 0 : index
    %10 = vector.load %arg4[%c0_6, %c0_7] : memref<128x128xbf16, #tpu.memory_space<vmem>>, vector<128x128xbf16>
    %cst_8 = arith.constant dense<0.000000e+00> : vector<16x128xf32>
    %11 = tpu.matmul %9, %10, %cst_8 {dimension_numbers = #tpu.dot_dimension_numbers<[1], [0], [0], [1], [0, 0, 1, 1], [], []>} : vector<16x128xbf16>, vector<128x128xbf16>, vector<16x128xf32> -> vector<16x128xf32>
    %c0_9 = arith.constant 0 : index
    %c0_10 = arith.constant 0 : index
    %12 = vector.load %arg5[%c0_9, %c0_10] : memref<1x128xf32, #tpu.memory_space<vmem>>, vector<1x128xf32>
    %13 = vector.broadcast %12 : vector<1x128xf32> to vector<16x128xf32>
    %14 = arith.addf %11, %13 : vector<16x128xf32>
    %cst_11 = arith.constant 0.000000e+00 : f32
    %15 = vector.broadcast %cst_11 : f32 to vector<16x128xf32>
    %16 = arith.maximumf %14, %15 : vector<16x128xf32>
    %17 = arith.truncf %16 : vector<16x128xf32> to vector<16x128xbf16>
    %c0_12 = arith.constant 0 : index
    %c0_13 = arith.constant 0 : index
    %18 = vector.load %arg6[%c0_12, %c0_13] : memref<128x128xbf16, #tpu.memory_space<vmem>>, vector<128x128xbf16>
    %cst_14 = arith.constant dense<0.000000e+00> : vector<16x128xf32>
    %19 = tpu.matmul %17, %18, %cst_14 {dimension_numbers = #tpu.dot_dimension_numbers<[1], [0], [0], [1], [0, 0, 1, 1], [], []>} : vector<16x128xbf16>, vector<128x128xbf16>, vector<16x128xf32> -> vector<16x128xf32>
    %c0_15 = arith.constant 0 : index
    %c0_16 = arith.constant 0 : index
    %20 = vector.load %arg7[%c0_15, %c0_16] : memref<1x128xf32, #tpu.memory_space<vmem>>, vector<1x128xf32>
    %21 = vector.broadcast %20 : vector<1x128xf32> to vector<16x128xf32>
    %22 = arith.addf %19, %21 : vector<16x128xf32>
    %23 = arith.truncf %22 : vector<16x128xf32> to vector<16x128xbf16>
    %c0_17 = arith.constant 0 : index
    %c0_18 = arith.constant 0 : index
    %24 = vector.load %arg8[%c0_17, %c0_18] : memref<16x128xbf16, #tpu.memory_space<vmem>>, vector<16x128xbf16>
    tpu.vector_store %arg8[%c0_17, %c0_18], %23 {strides = array<i32>} : memref<16x128xbf16, #tpu.memory_space<vmem>>, vector<16x128xbf16>,
    return
  }
  func.func @transform_0(%arg0: i32) -> (i32, i32) {
    %c0_i32 = arith.constant 0 : i32
    %c0_i32_0 = arith.constant 0 : i32
    return %arg0, %c0_i32 : i32, i32
  }
  func.func @transform_1(%arg0: i32) -> (i32, i32) {
    %c0_i32 = arith.constant 0 : i32
    %c0_i32_0 = arith.constant 0 : i32
    %c0_i32_1 = arith.constant 0 : i32
    return %c0_i32, %c0_i32_0 : i32, i32
  }
  func.func @transform_2(%arg0: i32) -> (i32, i32) {
    %c0_i32 = arith.constant 0 : i32
    %c0_i32_0 = arith.constant 0 : i32
    %c0_i32_1 = arith.constant 0 : i32
    return %c0_i32, %c0_i32_0 : i32, i32
  }
  func.func @transform_3(%arg0: i32) -> (i32, i32) {
    %c0_i32 = arith.constant 0 : i32
    %c0_i32_0 = arith.constant 0 : i32
    %c0_i32_1 = arith.constant 0 : i32
    return %c0_i32, %c0_i32_0 : i32, i32
  }
  func.func @transform_4(%arg0: i32) -> (i32, i32) {
    %c0_i32 = arith.constant 0 : i32
    %c0_i32_0 = arith.constant 0 : i32
    %c0_i32_1 = arith.constant 0 : i32
    return %c0_i32, %c0_i32_0 : i32, i32
  }
  func.func @transform_5(%arg0: i32) -> (i32, i32) {
    %c0_i32 = arith.constant 0 : i32
    %c0_i32_0 = arith.constant 0 : i32
    %c0_i32_1 = arith.constant 0 : i32
    return %c0_i32, %c0_i32_0 : i32, i32
  }
  func.func @transform_6(%arg0: i32) -> (i32, i32) {
    %c0_i32 = arith.constant 0 : i32
    %c0_i32_0 = arith.constant 0 : i32
    %c0_i32_1 = arith.constant 0 : i32
    return %c0_i32, %c0_i32_0 : i32, i32
  }
  func.func @transform_7(%arg0: i32) -> (i32, i32) {
    %c0_i32 = arith.constant 0 : i32
    %c0_i32_0 = arith.constant 0 : i32
    return %arg0, %c0_i32 : i32, i32
  }
}

</mosaic_0001>

<llo_original>
// kernel: tpu_custom_call.1
$region0: #{tpu_custom_call.1}
  #allocation0 [shape = 'u32[]', space=smem, size = 0x4, offset = 0x4, fixed_abs, tag = 'smem constant byte address 0x4 - core index']
  #allocation1 [shape = 'u32[144,128]{1,0:T(1,128)}', space=vmem, size = 0x12000, scoped, tag = 'internal scratch']
  %s0 = inlined_call_operand.hbm [shape: f32[32,120], index: 0, kind: input, shape index: {}]
  %s1 = inlined_call_operand.hbm [shape: bf16[120,128], index: 1, kind: input, shape index: {}]
  %s2 = inlined_call_operand.vmem [shape: f32[1,128], index: 2, kind: input, shape index: {}]
  %s3 = inlined_call_operand.hbm [shape: bf16[128,128], index: 3, kind: input, shape index: {}]
  %s4 = inlined_call_operand.vmem [shape: f32[1,128], index: 4, kind: input, shape index: {}]
  %s5 = inlined_call_operand.hbm [shape: bf16[128,128], index: 5, kind: input, shape index: {}]
  %s6 = inlined_call_operand.vmem [shape: f32[1,128], index: 6, kind: input, shape index: {}]
  %s7 = inlined_call_operand.hbm [shape: bf16[32,128], index: 7, kind: output, shape index: {}]
  %s8 = sld [smem:[#allocation0]]
  $region77: #{tpu_custom_call.1} parent=0
    _
  %s10 = ssub.s32 1, %s8
  %s11 = scalar_select 0, %s10, %s8
  $region1: #{tpu_custom_call.1} parent=0
    #allocation2 [shape = 'u8[16384]{0}', space=vmem, size = 0x4000, scoped, tag = 'input window, operand 0']
    #allocation3 [shape = 's32[2]{0}', space=sflag, size = 0x8, scoped, tag = 'scoped memory for tpu_custom_call.1']
    #allocation4 [shape = 's32[2]{0}', space=sflag, size = 0x8, scoped, tag = 'scoped memory for tpu_custom_call.1']
    #allocation5 [shape = 'u8[30720]{0}', space=vmem, size = 0x7800, scoped, tag = 'input window, operand 1, single buffered']
    #allocation6 [shape = 's32[1]{0}', space=sflag, size = 0x4, scoped, tag = 'scoped memory for tpu_custom_call.1']
    #allocation7 [shape = 'u8[32768]{0}', space=vmem, size = 0x8000, scoped, tag = 'input window, operand 3, single buffered']
    #allocation8 [shape = 'u8[32768]{0}', space=vmem, size = 0x8000, scoped, tag = 'input window, operand 5, single buffered']
    #allocation9 [shape = 's32[1]{0}', space=sflag, size = 0x4, scoped, tag = 'scoped memory for tpu_custom_call.1']
    #allocation10 [shape = 'u8[8192]{0}', space=vmem, size = 0x2000, scoped, tag = 'output window, operand 0']
    %12 = vsyncpa [#allocation3], 0
    %s13 = scalar_lea.sflag [#allocation3], 1
    %14 = vsyncpa %s13, 0
    %15 = vsyncpa [#allocation6], 0
    %16 = vsyncpa [#allocation9], 0
    %17 = vsyncpa [#allocation4], 0
    %s18 = scalar_lea.sflag [#allocation4], 1
    %19 = vsyncpa %s18, 0
    loop: start=0, step=1, limit=4
    $region2: #{tpu_custom_call.1} parent=1 // loop_pre_header
      _
    $region3: #{tpu_custom_call.1} parent=1 // loop_header
      %s21 = sphi 0, %s25
      %p22 = scmp.ge.s32.totalorder %s21, 4
      %s31 = sphi 0, %s33
      %s34 = sphi 0, %s31
      %s35 = sphi 0, %s34
      %s51 = sphi 0, %s35
      %s55 = sphi 0, %s55
      %s57 = sphi 0, %s55
      %s58 = sphi 0, %s57
      %s72 = sphi 0, %s58
      %s76 = sphi 0, %s76
      %s78 = sphi 0, %s76
      %s79 = sphi 0, %s78
      %s93 = sphi 0, %s79
      %s97 = sphi 0, %s97
      %s99 = sphi 0, %s97
      %s100 = sphi 0, %s99
      %s114 = sphi 0, %s100
      %s118 = sphi 0, %s118
      %s120 = sphi 0, %s118
      %s121 = sphi 0, %s120
      %s135 = sphi 0, %s121
      %s139 = sphi 0, %s139
      %s141 = sphi 0, %s139
      %s142 = sphi 0, %s141
      %s156 = sphi 0, %s142
      %s160 = sphi 0, %s160
      %s162 = sphi 0, %s160
      %s163 = sphi 0, %s162
      %s177 = sphi 0, %s163
      %s183 = sphi 0, %s185
      %s186 = sphi 0, %s183
      %s187 = sphi 0, %s186
      %s203 = sphi 0, %s187
    $region4: #{tpu_custom_call.1} parent=1 // loop_header_branch
      %24 = sbr.rel (%p22) target = $region8
    $region5: #{tpu_custom_call.1} parent=1 // loop_body
      %s26 = ssub.s32 %s21, 1
      %s27 = ssub.s32 %s21, 2
      %s28 = sadd.s32 %s21, 1
      %s29 = ssub.s32 %s21, %s28
      %p30 = scmp.eq.s32.totalorder %s29, 0
      %s32 = sadd.s32 %s31, 1
      %s33 = scalar_select %p30, %s31, %s32
      %p36 = pneg %p30
      %p37 = scmp.eq.s32.totalorder %s21, 1
      %p38 = por %p36, %p37
      %p39 = scmp.ne.s32.totalorder %s31, %s34
      %p40 = scmp.eq.s32.totalorder %s21, 0
      %p41 = por %p39, %p40
      %p42 = scmp.ne.s32.totalorder %s31, %s34
      %p43 = scmp.eq.s32.totalorder %s26, 1
      %p44 = por %p42, %p43
      %p45 = scmp.ne.s32.totalorder %s34, %s35
      %p46 = scmp.eq.s32.totalorder %s26, 0
      %p47 = por %p45, %p46
      %p48 = scmp.ne.s32.totalorder %s34, %s35
      %p49 = scmp.eq.s32.totalorder %s27, 1
      %p50 = por %p48, %p49
      %p52 = scmp.ne.s32.totalorder %s35, %s51
      %p53 = scmp.eq.s32.totalorder %s27, 0
      %p54 = por %p52, %p53
      %s56 = sadd.s32 %s55, 1
      %p59 = scmp.eq.s32.totalorder %s21, 1
      %p60 = scmp.ne.s32.totalorder %s55, %s57
      %p61 = scmp.eq.s32.totalorder %s21, 0
      %p62 = por %p60, %p61
      %p63 = scmp.ne.s32.totalorder %s55, %s57
      %p64 = scmp.eq.s32.totalorder %s26, 1
      %p65 = por %p63, %p64
      %p66 = scmp.ne.s32.totalorder %s57, %s58
      %p67 = scmp.eq.s32.totalorder %s26, 0
      %p68 = por %p66, %p67
      %p69 = scmp.ne.s32.totalorder %s57, %s58
      %p70 = scmp.eq.s32.totalorder %s27, 1
      %p71 = por %p69, %p70
      %p73 = scmp.ne.s32.totalorder %s58, %s72
      %p74 = scmp.eq.s32.totalorder %s27, 0
      %p75 = por %p73, %p74
      %s77 = sadd.s32 %s76, 1
      %p80 = scmp.eq.s32.totalorder %s21, 1
      %p81 = scmp.ne.s32.totalorder %s76, %s78
      %p82 = scmp.eq.s32.totalorder %s21, 0
      %p83 = por %p81, %p82
      %p84 = scmp.ne.s32.totalorder %s76, %s78
      %p85 = scmp.eq.s32.totalorder %s26, 1
      %p86 = por %p84, %p85
      %p87 = scmp.ne.s32.totalorder %s78, %s79
      %p88 = scmp.eq.s32.totalorder %s26, 0
      %p89 = por %p87, %p88
      %p90 = scmp.ne.s32.totalorder %s78, %s79
      %p91 = scmp.eq.s32.totalorder %s27, 1
      %p92 = por %p90, %p91
      %p94 = scmp.ne.s32.totalorder %s79, %s93
      %p95 = scmp.eq.s32.totalorder %s27, 0
      %p96 = por %p94, %p95
      %s98 = sadd.s32 %s97, 1
      %p101 = scmp.eq.s32.totalorder %s21, 1
      %p102 = scmp.ne.s32.totalorder %s97, %s99
      %p103 = scmp.eq.s32.totalorder %s21, 0
      %p104 = por %p102, %p103
      %p105 = scmp.ne.s32.totalorder %s97, %s99
      %p106 = scmp.eq.s32.totalorder %s26, 1
      %p107 = por %p105, %p106
      %p108 = scmp.ne.s32.totalorder %s99, %s100
      %p109 = scmp.eq.s32.totalorder %s26, 0
      %p110 = por %p108, %p109
      %p111 = scmp.ne.s32.totalorder %s99, %s100
      %p112 = scmp.eq.s32.totalorder %s27, 1
      %p113 = por %p111, %p112
      %p115 = scmp.ne.s32.totalorder %s100, %s114
      %p116 = scmp.eq.s32.totalorder %s27, 0
      %p117 = por %p115, %p116
      %s119 = sadd.s32 %s118, 1
      %p122 = scmp.eq.s32.totalorder %s21, 1
      %p123 = scmp.ne.s32.totalorder %s118, %s120
      %p124 = scmp.eq.s32.totalorder %s21, 0
      %p125 = por %p123, %p124
      %p126 = scmp.ne.s32.totalorder %s118, %s120
      %p127 = scmp.eq.s32.totalorder %s26, 1
      %p128 = por %p126, %p127
      %p129 = scmp.ne.s32.totalorder %s120, %s121
      %p130 = scmp.eq.s32.totalorder %s26, 0
      %p131 = por %p129, %p130
      %p132 = scmp.ne.s32.totalorder %s120, %s121
      %p133 = scmp.eq.s32.totalorder %s27, 1
      %p134 = por %p132, %p133
      %p136 = scmp.ne.s32.totalorder %s121, %s135
      %p137 = scmp.eq.s32.totalorder %s27, 0
      %p138 = por %p136, %p137
      %s140 = sadd.s32 %s139, 1
      %p143 = scmp.eq.s32.totalorder %s21, 1
      %p144 = scmp.ne.s32.totalorder %s139, %s141
      %p145 = scmp.eq.s32.totalorder %s21, 0
      %p146 = por %p144, %p145
      %p147 = scmp.ne.s32.totalorder %s139, %s141
      %p148 = scmp.eq.s32.totalorder %s26, 1
      %p149 = por %p147, %p148
      %p150 = scmp.ne.s32.totalorder %s141, %s142
      %p151 = scmp.eq.s32.totalorder %s26, 0
      %p152 = por %p150, %p151
      %p153 = scmp.ne.s32.totalorder %s141, %s142
      %p154 = scmp.eq.s32.totalorder %s27, 1
      %p155 = por %p153, %p154
      %p157 = scmp.ne.s32.totalorder %s142, %s156
      %p158 = scmp.eq.s32.totalorder %s27, 0
      %p159 = por %p157, %p158
      %s161 = sadd.s32 %s160, 1
      %p164 = scmp.eq.s32.totalorder %s21, 1
      %p165 = scmp.ne.s32.totalorder %s160, %s162
      %p166 = scmp.eq.s32.totalorder %s21, 0
      %p167 = por %p165, %p166
      %p168 = scmp.ne.s32.totalorder %s160, %s162
      %p169 = scmp.eq.s32.totalorder %s26, 1
      %p170 = por %p168, %p169
      %p171 = scmp.ne.s32.totalorder %s162, %s163
      %p172 = scmp.eq.s32.totalorder %s26, 0
      %p173 = por %p171, %p172
      %p174 = scmp.ne.s32.totalorder %s162, %s163
      %p175 = scmp.eq.s32.totalorder %s27, 1
      %p176 = por %p174, %p175
      %p178 = scmp.ne.s32.totalorder %s163, %s177
      %p179 = scmp.eq.s32.totalorder %s27, 0
      %p180 = por %p178, %p179
      %s181 = ssub.s32 %s21, %s28
      %p182 = scmp.eq.s32.totalorder %s181, 0
      %s184 = sadd.s32 %s183, 1
      %s185 = scalar_select %p182, %s183, %s184
      %p188 = pneg %p182
      %p189 = scmp.eq.s32.totalorder %s21, 1
      %p190 = por %p188, %p189
      %p191 = scmp.ne.s32.totalorder %s183, %s186
      %p192 = scmp.eq.s32.totalorder %s21, 0
      %p193 = por %p191, %p192
      %p194 = scmp.ne.s32.totalorder %s183, %s186
      %p195 = scmp.eq.s32.totalorder %s26, 1
      %p196 = por %p194, %p195
      %p197 = scmp.ne.s32.totalorder %s186, %s187
      %p198 = scmp.eq.s32.totalorder %s26, 0
      %p199 = por %p197, %p198
      %p200 = scmp.ne.s32.totalorder %s186, %s187
      %p201 = scmp.eq.s32.totalorder %s27, 1
      %p202 = por %p200, %p201
      %p204 = scmp.ne.s32.totalorder %s187, %s203
      %p205 = scmp.eq.s32.totalorder %s27, 0
      %p206 = por %p204, %p205
      %p207 = scmp.le.s32.totalorder 1, %s21
      %p208 = scmp.lt.s32.totalorder %s21, 3
      %p209 = pnand %p207, %p208
      %p210 = pneg %p209
      // Predicated region
      $region9: #{tpu_custom_call.1} parent=5 // pred_check
        _
      $region10: #{tpu_custom_call.1} parent=5 // pred_check_branch
        %212 = sbr.rel (%p209) target = $region12
      $region11: #{tpu_custom_call.1} parent=5 // pred_region
        %s213 = ssub.s32 %s21, 1
        // Predicated region
        $region13: #{tpu_custom_call.1} parent=11 // pred_check
          %p214 = pneg %p68
        $region14: #{tpu_custom_call.1} parent=11 // pred_check_branch
          %216 = sbr.rel (%p214) target = $region16
        $region15: #{tpu_custom_call.1} parent=11 // pred_region
          %s218 = ssub.s32 960, 960
          %219 = vsyncadd [#allocation6], %s218
          %s220 = sshll.u32 [#allocation5], 4
          %s221 = int_to_ptr.vmem [resolvable:$true] %s220
          %226 = dma.hbm_to_vmem [thread:$0]  %s1, 960, %s221, [#allocation6], 64, 64, 4
        $region16: #{tpu_custom_call.1} parent=11 // pred_fallthru
          _
        // Predicated region
        $region17: #{tpu_custom_call.1} parent=11 // pred_check
          %p227 = pneg %p89
        $region18: #{tpu_custom_call.1} parent=11 // pred_check_branch
          %229 = sbr.rel (%p227) target = $region20
        $region19: #{tpu_custom_call.1} parent=11 // pred_region
          _
        $region20: #{tpu_custom_call.1} parent=11 // pred_fallthru
          _
        // Predicated region
        $region21: #{tpu_custom_call.1} parent=11 // pred_check
          %p230 = pneg %p110
        $region22: #{tpu_custom_call.1} parent=11 // pred_check_branch
          %232 = sbr.rel (%p230) target = $region24
        $region23: #{tpu_custom_call.1} parent=11 // pred_region
          %s234 = ssub.s32 1024, 1024
          %235 = vsyncadd [#allocation6], %s234
          %s236 = sshll.u32 [#allocation7], 4
          %s237 = int_to_ptr.vmem [resolvable:$true] %s236
          %242 = dma.hbm_to_vmem [thread:$0]  %s3, 1024, %s237, [#allocation6], 64, 64, 4
        $region24: #{tpu_custom_call.1} parent=11 // pred_fallthru
          _
        // Predicated region
        $region25: #{tpu_custom_call.1} parent=11 // pred_check
          %p243 = pneg %p131
        $region26: #{tpu_custom_call.1} parent=11 // pred_check_branch
          %245 = sbr.rel (%p243) target = $region28
        $region27: #{tpu_custom_call.1} parent=11 // pred_region
          _
        $region28: #{tpu_custom_call.1} parent=11 // pred_fallthru
          _
        // Predicated region
        $region29: #{tpu_custom_call.1} parent=11 // pred_check
          %p246 = pneg %p152
        $region30: #{tpu_custom_call.1} parent=11 // pred_check_branch
          %248 = sbr.rel (%p246) target = $region32
        $region31: #{tpu_custom_call.1} parent=11 // pred_region
          %s250 = ssub.s32 1024, 1024
          %251 = vsyncadd [#allocation9], %s250
          %s252 = sshll.u32 [#allocation8], 4
          %s253 = int_to_ptr.vmem [resolvable:$true] %s252
          %258 = dma.hbm_to_vmem [thread:$0]  %s5, 1024, %s253, [#allocation9], 64, 64, 4
        $region32: #{tpu_custom_call.1} parent=11 // pred_fallthru
          _
        // Predicated region
        $region33: #{tpu_custom_call.1} parent=11 // pred_check
          %p259 = pneg %p173
        $region34: #{tpu_custom_call.1} parent=11 // pred_check_branch
          %261 = sbr.rel (%p259) target = $region36
        $region35: #{tpu_custom_call.1} parent=11 // pred_region
          _
        $region36: #{tpu_custom_call.1} parent=11 // pred_fallthru
          _
      $region12: #{tpu_custom_call.1} parent=5 // pred_fallthru
        _
      %p262 = scmp.lt.s32.totalorder %s21, 2
      // Predicated region
      $region37: #{tpu_custom_call.1} parent=5 // pred_check
        %p263 = pneg %p262
      $region38: #{tpu_custom_call.1} parent=5 // pred_check_branch
        %265 = sbr.rel (%p263) target = $region40
      $region39: #{tpu_custom_call.1} parent=5 // pred_region
        // Predicated region
        $region41: #{tpu_custom_call.1} parent=39 // pred_check
          %p266 = pneg %p41
        $region42: #{tpu_custom_call.1} parent=39 // pred_check_branch
          %268 = sbr.rel (%p266) target = $region44
        $region43: #{tpu_custom_call.1} parent=39 // pred_region
          %s269 = sand.u32 %s31, 1
          %s270 = scalar_lea.sflag [#allocation3], %s269
          %s271 = sand.u32 %s31, 1
          %s272 = smul.addr %s271, 16
          %s273 = scalar_lea.vmem [#allocation2], %s272
          %s274 = smul.u32 2, %s21
          %s276 = ssub.s32 256, 256
          %277 = vsyncadd %s270, %s276
          %s278 = smul.addr %s274, 128
          %s279 = scalar_lea.hbm %s0, %s278
          %s280 = sshll.u32 %s273, 4
          %s281 = int_to_ptr.vmem [resolvable:$true] %s280
          %286 = dma.hbm_to_vmem [thread:$0]  %s279, 256, %s281, %s270, 128, 128, 8
        $region44: #{tpu_custom_call.1} parent=39 // pred_fallthru
          _
      $region40: #{tpu_custom_call.1} parent=5 // pred_fallthru
        _
      %p287 = scmp.le.s32.totalorder 1, %s21
      %p288 = scmp.lt.s32.totalorder %s21, 3
      %p289 = pnand %p287, %p288
      %p290 = pneg %p289
      // Predicated region
      $region45: #{tpu_custom_call.1} parent=5 // pred_check
        _
      $region46: #{tpu_custom_call.1} parent=5 // pred_check_branch
        %292 = sbr.rel (%p289) target = $region48
      $region47: #{tpu_custom_call.1} parent=5 // pred_region
        %s293 = ssub.s32 %s21, 1
        %s294 = sand.u32 %s34, 1
        %s295 = scalar_lea.sflag [#allocation3], %s294
        %s296 = sand.u32 %s34, 1
        %s297 = smul.addr %s296, 16
        %s298 = scalar_lea.vmem [#allocation2], %s297
        // Predicated region
        $region49: #{tpu_custom_call.1} parent=47 // pred_check
          %p299 = pneg %p47
        $region50: #{tpu_custom_call.1} parent=47 // pred_check_branch
          %301 = sbr.rel (%p299) target = $region52
        $region51: #{tpu_custom_call.1} parent=47 // pred_region
          %302 = dma.done %s295, 256
        $region52: #{tpu_custom_call.1} parent=47 // pred_fallthru
          _
        // Predicated region
        $region53: #{tpu_custom_call.1} parent=47 // pred_check
          %p303 = pneg %p68
        $region54: #{tpu_custom_call.1} parent=47 // pred_check_branch
          %305 = sbr.rel (%p303) target = $region56
        $region55: #{tpu_custom_call.1} parent=47 // pred_region
          %306 = dma.done [#allocation6], 960
        $region56: #{tpu_custom_call.1} parent=47 // pred_fallthru
          _
        // Predicated region
        $region57: #{tpu_custom_call.1} parent=47 // pred_check
          %p307 = pneg %p110
        $region58: #{tpu_custom_call.1} parent=47 // pred_check_branch
          %309 = sbr.rel (%p307) target = $region60
        $region59: #{tpu_custom_call.1} parent=47 // pred_region
          %310 = dma.done [#allocation6], 1024
        $region60: #{tpu_custom_call.1} parent=47 // pred_fallthru
          _
        // Predicated region
        $region61: #{tpu_custom_call.1} parent=47 // pred_check
          %p311 = pneg %p152
        $region62: #{tpu_custom_call.1} parent=47 // pred_check_branch
          %313 = sbr.rel (%p311) target = $region64
        $region63: #{tpu_custom_call.1} parent=47 // pred_region
          %314 = dma.done [#allocation9], 1024
        $region64: #{tpu_custom_call.1} parent=47 // pred_fallthru
          _
        %s315 = sand.u32 %s34, 1
        %s316 = scalar_lea.sflag [#allocation3], %s315
        %s317 = sand.u32 %s34, 1
        %s318 = smul.addr %s317, 16
        %s319 = scalar_lea.vmem [#allocation2], %s318
        %p320 = pneg %p47
        %p321 = pneg %p44
        %p322 = pneg %p68
        %p323 = pneg %p65
        %p324 = pneg %p89
        %p325 = pneg %p86
        %p326 = pneg %p110
        %p327 = pneg %p107
        %p328 = pneg %p131
        %p329 = pneg %p128
        %p330 = pneg %p152
        %p331 = pneg %p149
        %p332 = pneg %p173
        %p333 = pneg %p170
        %p334 = pneg %p199
        %p335 = pneg %p196
        %s336 = sand.u32 %s186, 1
        %s337 = scalar_lea.sflag [#allocation4], %s336
        %s338 = sand.u32 %s186, 1
        %s339 = smul.addr %s338, 8
        %s340 = scalar_lea.vmem [#allocation10], %s339
        %s341 = smul.u32 2, %s26
        %s342 = smul.u32 2, %s26
        %v344 = vld [vmem:[%s298] sm:$0xff]
        %v345 = vld [vmem:[%s298 + $0x8] sm:$0xff]
        %v346 = vpack.c.bf16 %v345, %v344
        %v347 = vld [vmem:[#allocation5] sm:$0xf]
        %v348 = vld [vmem:[#allocation5 + $0x4] sm:$0xf]
        %v349 = vld [vmem:[#allocation5 + $0x8] sm:$0xf]
        %v350 = vld [vmem:[#allocation5 + $0xc] sm:$0xf]
        %v351 = vld [vmem:[#allocation5 + $0x10] sm:$0xf]
        %v352 = vld [vmem:[#allocation5 + $0x14] sm:$0xf]
        %v353 = vld [vmem:[#allocation5 + $0x18] sm:$0xf]
        %v354 = vld [vmem:[#allocation5 + $0x1c] sm:$0xf]
        %v355 = vld [vmem:[#allocation5 + $0x20] sm:$0xf]
        %v356 = vld [vmem:[#allocation5 + $0x24] sm:$0xf]
        %v357 = vld [vmem:[#allocation5 + $0x28] sm:$0xf]
        %v358 = vld [vmem:[#allocation5 + $0x2c] sm:$0xf]
        %v359 = vld [vmem:[#allocation5 + $0x30] sm:$0xf]
        %v360 = vld [vmem:[#allocation5 + $0x34] sm:$0xf]
        %v361 = vld [vmem:[#allocation5 + $0x38] sm:$0xf]
        %v362 = vld [vmem:[%s2] sm:$0x1]
        %v364 = vlaneseq
        %v365 = vshrl.u32 %v364, 7
        %v366 = vsub.s32 0, %v365
        %v367 = vrot.slane %v362, %v366
        %v384 = vunpack.c.l.b16 %v347
        %v385 = vunpack.c.l.b16 %v348
        %v386 = vunpack.c.l.b16 %v349
        %v387 = vunpack.c.l.b16 %v350
        %v388 = vunpack.c.l.b16 %v351
        %v389 = vunpack.c.l.b16 %v352
        %v390 = vunpack.c.l.b16 %v353
        %v391 = vunpack.c.l.b16 %v354
        %v392 = vunpack.c.l.b16 %v355
        %v393 = vunpack.c.l.b16 %v356
        %v394 = vunpack.c.l.b16 %v357
        %v395 = vunpack.c.l.b16 %v358
        %v396 = vunpack.c.l.b16 %v359
        %v397 = vunpack.c.l.b16 %v360
        %v398 = vunpack.c.l.b16 %v361
        %v399 = vpack.c.b16 %v385, %v384
        %v400 = vpack.c.b16 %v387, %v386
        %v401 = vpack.c.b16 %v389, %v388
        %v402 = vpack.c.b16 %v391, %v390
        %v403 = vpack.c.b16 %v393, %v392
        %v404 = vpack.c.b16 %v395, %v394
        %v405 = vpack.c.b16 %v397, %v396
        %v406 = vpack.c.b16 %v398, %v398
        %vm414 = vcmask 982016
        %v416 = vsel %vm414, %v346, 0
        %vm418 = vcmask 1043456
        %v420 = vsel %vm418, %v406, 0
        %422 = vmatprep.subr.bf16.mxu0 0
        %423 = vmatpush1.bf16.msra.mxu0 %v420
        %424 = vmatprep.subr.bf16.mxu0 0
        %425 = vmatpush1.bf16.msra.mxu0 %v405
        %426 = vmatprep.subr.bf16.mxu0 0
        %427 = vmatpush1.bf16.msra.mxu0 %v404
        %428 = vmatprep.subr.bf16.mxu0 0
        %429 = vmatpush1.bf16.msra.mxu0 %v403
        %430 = vmatprep.subr.bf16.mxu0 0
        %431 = vmatpush1.bf16.msra.mxu0 %v402
        %432 = vmatprep.subr.bf16.mxu0 0
        %433 = vmatpush1.bf16.msra.mxu0 %v401
        %434 = vmatprep.subr.bf16.mxu0 0
        %435 = vmatpush1.bf16.msra.mxu0 %v400
        %436 = vmatprep.subr.bf16.mxu0 0
        %437 = vmatpush1.bf16.msra.mxu0 %v399
        %438 = vmatprep.subr.bf16.mxu0 0
        %439 = vmatpush2.bf16.msra.mxu0 0
        %440 = vmatprep.subr.bf16.mxu0 0
        %441 = vmatpush2.bf16.msra.mxu0 0
        %442 = vmatprep.subr.bf16.mxu0 0
        %443 = vmatpush2.bf16.msra.mxu0 0
        %444 = vmatprep.subr.bf16.mxu0 0
        %445 = vmatpush2.bf16.msra.mxu0 0
        %446 = vmatprep.subr.bf16.mxu0 0
        %447 = vmatpush2.bf16.msra.mxu0 0
        %448 = vmatprep.subr.bf16.mxu0 0
        %449 = vmatpush2.bf16.msra.mxu0 0
        %450 = vmatprep.subr.bf16.mxu0 0
        %451 = vmatpush2.bf16.msra.mxu0 0
        %452 = vmatprep.subr.bf16.mxu0 0
        %453 = vmatpush2.bf16.msra.mxu0 0
        %454 = vmatprep.mubr.bf16.mxu0 0
        %455 = vmatmul.mubr.bf16.gmra.mxu0 %v416
        %v456 = vpop.f32.mrf.mxu0
        %v457 = vadd.f32 %v367, %v456
        %v458 = vpop.f32.mrf.mxu0
        %v459 = vpop.f32.mrf.mxu0
        %v460 = vadd.f32 %v367, %v459
        %v461 = vpop.f32.mrf.mxu0
        %462 = vdwg.mxu0
        %v463 = vmax.f32 %v457, 0.0
        %v464 = vmax.f32 %v460, 0.0
        %v465 = vpack.c.bf16 %v464, %v463
        %v466 = vld [vmem:[#allocation7] sm:$0xf]
        %v467 = vld [vmem:[#allocation7 + $0x4] sm:$0xf]
        %v468 = vld [vmem:[#allocation7 + $0x8] sm:$0xf]
        %v469 = vld [vmem:[#allocation7 + $0xc] sm:$0xf]
        %v470 = vld [vmem:[#allocation7 + $0x10] sm:$0xf]
        %v471 = vld [vmem:[#allocation7 + $0x14] sm:$0xf]
        %v472 = vld [vmem:[#allocation7 + $0x18] sm:$0xf]
        %v473 = vld [vmem:[#allocation7 + $0x1c] sm:$0xf]
        %v474 = vld [vmem:[#allocation7 + $0x20] sm:$0xf]
        %v475 = vld [vmem:[#allocation7 + $0x24] sm:$0xf]
        %v476 = vld [vmem:[#allocation7 + $0x28] sm:$0xf]
        %v477 = vld [vmem:[#allocation7 + $0x2c] sm:$0xf]
        %v478 = vld [vmem:[#allocation7 + $0x30] sm:$0xf]
        %v479 = vld [vmem:[#allocation7 + $0x34] sm:$0xf]
        %v480 = vld [vmem:[#allocation7 + $0x38] sm:$0xf]
        %v481 = vld [vmem:[#allocation7 + $0x3c] sm:$0xf]
        %v482 = vld [vmem:[%s4] sm:$0x1]
        %v484 = vlaneseq
        %v485 = vshrl.u32 %v484, 7
        %v486 = vsub.s32 0, %v485
        %v487 = vrot.slane %v482, %v486
        %v505 = vunpack.c.l.b16 %v466
        %v506 = vunpack.c.l.b16 %v467
        %v507 = vunpack.c.l.b16 %v468
        %v508 = vunpack.c.l.b16 %v469
        %v509 = vunpack.c.l.b16 %v470
        %v510 = vunpack.c.l.b16 %v471
        %v511 = vunpack.c.l.b16 %v472
        %v512 = vunpack.c.l.b16 %v473
        %v513 = vunpack.c.l.b16 %v474
        %v514 = vunpack.c.l.b16 %v475
        %v515 = vunpack.c.l.b16 %v476
        %v516 = vunpack.c.l.b16 %v477
        %v517 = vunpack.c.l.b16 %v478
        %v518 = vunpack.c.l.b16 %v479
        %v519 = vunpack.c.l.b16 %v480
        %v520 = vunpack.c.l.b16 %v481
        %v521 = vpack.c.b16 %v506, %v505
        %v522 = vpack.c.b16 %v508, %v507
        %v523 = vpack.c.b16 %v510, %v509
        %v524 = vpack.c.b16 %v512, %v511
        %v525 = vpack.c.b16 %v514, %v513
        %v526 = vpack.c.b16 %v516, %v515
        %v527 = vpack.c.b16 %v518, %v517
        %v528 = vpack.c.b16 %v520, %v519
        %537 = vmatprep.subr.bf16.mxu0 0
        %538 = vmatpush1.bf16.msra.mxu0 %v528
        %539 = vmatprep.subr.bf16.mxu0 0
        %540 = vmatpush1.bf16.msra.mxu0 %v527
        %541 = vmatprep.subr.bf16.mxu0 0
        %542 = vmatpush1.bf16.msra.mxu0 %v526
        %543 = vmatprep.subr.bf16.mxu0 0
        %544 = vmatpush1.bf16.msra.mxu0 %v525
        %545 = vmatprep.subr.bf16.mxu0 0
        %546 = vmatpush1.bf16.msra.mxu0 %v524
        %547 = vmatprep.subr.bf16.mxu0 0
        %548 = vmatpush1.bf16.msra.mxu0 %v523
        %549 = vmatprep.subr.bf16.mxu0 0
        %550 = vmatpush1.bf16.msra.mxu0 %v522
        %551 = vmatprep.subr.bf16.mxu0 0
        %552 = vmatpush1.bf16.msra.mxu0 %v521
        %553 = vmatprep.subr.bf16.mxu0 0
        %554 = vmatpush2.bf16.msra.mxu0 0
        %555 = vmatprep.subr.bf16.mxu0 0
        %556 = vmatpush2.bf16.msra.mxu0 0
        %557 = vmatprep.subr.bf16.mxu0 0
        %558 = vmatpush2.bf16.msra.mxu0 0
        %559 = vmatprep.subr.bf16.mxu0 0
        %560 = vmatpush2.bf16.msra.mxu0 0
        %561 = vmatprep.subr.bf16.mxu0 0
        %562 = vmatpush2.bf16.msra.mxu0 0
        %563 = vmatprep.subr.bf16.mxu0 0
        %564 = vmatpush2.bf16.msra.mxu0 0
        %565 = vmatprep.subr.bf16.mxu0 0
        %566 = vmatpush2.bf16.msra.mxu0 0
        %567 = vmatprep.subr.bf16.mxu0 0
        %568 = vmatpush2.bf16.msra.mxu0 0
        %569 = vmatprep.mubr.bf16.mxu0 0
        %570 = vmatmul.mubr.bf16.gmra.mxu0 %v465
        %v571 = vpop.f32.mrf.mxu0
        %v572 = vadd.f32 %v487, %v571
        %v573 = vpop.f32.mrf.mxu0
        %v574 = vpop.f32.mrf.mxu0
        %v575 = vadd.f32 %v487, %v574
        %v576 = vpop.f32.mrf.mxu0
        %577 = vdwg.mxu0
        %v578 = vmax.f32 %v572, 0.0
        %v579 = vmax.f32 %v575, 0.0
        %v580 = vpack.c.bf16 %v579, %v578
        %v581 = vld [vmem:[#allocation8] sm:$0xf]
        %v582 = vld [vmem:[#allocation8 + $0x4] sm:$0xf]
        %v583 = vld [vmem:[#allocation8 + $0x8] sm:$0xf]
        %v584 = vld [vmem:[#allocation8 + $0xc] sm:$0xf]
        %v585 = vld [vmem:[#allocation8 + $0x10] sm:$0xf]
        %v586 = vld [vmem:[#allocation8 + $0x14] sm:$0xf]
        %v587 = vld [vmem:[#allocation8 + $0x18] sm:$0xf]
        %v588 = vld [vmem:[#allocation8 + $0x1c] sm:$0xf]
        %v589 = vld [vmem:[#allocation8 + $0x20] sm:$0xf]
        %v590 = vld [vmem:[#allocation8 + $0x24] sm:$0xf]
        %v591 = vld [vmem:[#allocation8 + $0x28] sm:$0xf]
        %v592 = vld [vmem:[#allocation8 + $0x2c] sm:$0xf]
        %v593 = vld [vmem:[#allocation8 + $0x30] sm:$0xf]
        %v594 = vld [vmem:[#allocation8 + $0x34] sm:$0xf]
        %v595 = vld [vmem:[#allocation8 + $0x38] sm:$0xf]
        %v596 = vld [vmem:[#allocation8 + $0x3c] sm:$0xf]
        %v597 = vld [vmem:[%s6] sm:$0x1]
        %v599 = vlaneseq
        %v600 = vshrl.u32 %v599, 7
        %v601 = vsub.s32 0, %v600
        %v602 = vrot.slane %v597, %v601
        %v620 = vunpack.c.l.b16 %v581
        %v621 = vunpack.c.l.b16 %v582
        %v622 = vunpack.c.l.b16 %v583
        %v623 = vunpack.c.l.b16 %v584
        %v624 = vunpack.c.l.b16 %v585
        %v625 = vunpack.c.l.b16 %v586
        %v626 = vunpack.c.l.b16 %v587
        %v627 = vunpack.c.l.b16 %v588
        %v628 = vunpack.c.l.b16 %v589
        %v629 = vunpack.c.l.b16 %v590
        %v630 = vunpack.c.l.b16 %v591
        %v631 = vunpack.c.l.b16 %v592
        %v632 = vunpack.c.l.b16 %v593
        %v633 = vunpack.c.l.b16 %v594
        %v634 = vunpack.c.l.b16 %v595
        %v635 = vunpack.c.l.b16 %v596
        %v636 = vpack.c.b16 %v621, %v620
        %v637 = vpack.c.b16 %v623, %v622
        %v638 = vpack.c.b16 %v625, %v624
        %v639 = vpack.c.b16 %v627, %v626
        %v640 = vpack.c.b16 %v629, %v628
        %v641 = vpack.c.b16 %v631, %v630
        %v642 = vpack.c.b16 %v633, %v632
        %v643 = vpack.c.b16 %v635, %v634
        %652 = vmatprep.subr.bf16.mxu0 0
        %653 = vmatpush1.bf16.msra.mxu0 %v643
        %654 = vmatprep.subr.bf16.mxu0 0
        %655 = vmatpush1.bf16.msra.mxu0 %v642
        %656 = vmatprep.subr.bf16.mxu0 0
        %657 = vmatpush1.bf16.msra.mxu0 %v641
        %658 = vmatprep.subr.bf16.mxu0 0
        %659 = vmatpush1.bf16.msra.mxu0 %v640
        %660 = vmatprep.subr.bf16.mxu0 0
        %661 = vmatpush1.bf16.msra.mxu0 %v639
        %662 = vmatprep.subr.bf16.mxu0 0
        %663 = vmatpush1.bf16.msra.mxu0 %v638
        %664 = vmatprep.subr.bf16.mxu0 0
        %665 = vmatpush1.bf16.msra.mxu0 %v637
        %666 = vmatprep.subr.bf16.mxu0 0
        %667 = vmatpush1.bf16.msra.mxu0 %v636
        %668 = vmatprep.subr.bf16.mxu0 0
        %669 = vmatpush2.bf16.msra.mxu0 0
        %670 = vmatprep.subr.bf16.mxu0 0
        %671 = vmatpush2.bf16.msra.mxu0 0
        %672 = vmatprep.subr.bf16.mxu0 0
        %673 = vmatpush2.bf16.msra.mxu0 0
        %674 = vmatprep.subr.bf16.mxu0 0
        %675 = vmatpush2.bf16.msra.mxu0 0
        %676 = vmatprep.subr.bf16.mxu0 0
        %677 = vmatpush2.bf16.msra.mxu0 0
        %678 = vmatprep.subr.bf16.mxu0 0
        %679 = vmatpush2.bf16.msra.mxu0 0
        %680 = vmatprep.subr.bf16.mxu0 0
        %681 = vmatpush2.bf16.msra.mxu0 0
        %682 = vmatprep.subr.bf16.mxu0 0
        %683 = vmatpush2.bf16.msra.mxu0 0
        %684 = vmatprep.mubr.bf16.mxu0 0
        %685 = vmatmul.mubr.bf16.gmra.mxu0 %v580
        %v686 = vpop.f32.mrf.mxu0
        %v687 = vadd.f32 %v602, %v686
        %v688 = vpop.f32.mrf.mxu0
        %v689 = vpop.f32.mrf.mxu0
        %v690 = vadd.f32 %v602, %v689
        %v691 = vpop.f32.mrf.mxu0
        %692 = vdwg.mxu0
        %v693 = vpack.c.bf16 %v690, %v687
        %v695 = vunpack.c.l.b16 %v693
        %v696 = vunpack.c.h.b16 %v693
        %v697 = vpack.c.b16 %v695, %v695
        %v698 = vpack.c.b16 %v696, %v696
        %701 = vst [vmem:[%s340] sm:$0xf] %v697
        %702 = vst [vmem:[%s340 + $0x4] sm:$0xf] %v698
        %s703 = sand.u32 %s186, 1
        %s704 = scalar_lea.sflag [#allocation4], %s703
        %s705 = sand.u32 %s186, 1
        %s706 = smul.addr %s705, 8
        %s707 = scalar_lea.vmem [#allocation10], %s706
        // Predicated region
        $region65: #{tpu_custom_call.1} parent=47 // pred_check
          %p708 = pneg %p196
        $region66: #{tpu_custom_call.1} parent=47 // pred_check_branch
          %710 = sbr.rel (%p708) target = $region68
        $region67: #{tpu_custom_call.1} parent=47 // pred_region
          %s711 = smul.u32 2, %s26
          %s713 = ssub.s32 128, 128
          %714 = vsyncadd %s704, %s713
          %s715 = smul.addr %s711, 64
          %s716 = scalar_lea.hbm %s7, %s715
          %s717 = sshll.u32 %s707, 4
          %s718 = int_to_ptr.vmem [resolvable:$true] %s717
          %723 = dma.vmem_to_hbm [thread:$0]  %s718, 128, %s716, %s704, 64, 64, 4
        $region68: #{tpu_custom_call.1} parent=47 // pred_fallthru
          _
      $region48: #{tpu_custom_call.1} parent=5 // pred_fallthru
        _
      %p724 = scmp.le.s32.totalorder 2, %s21
      // Predicated region
      $region69: #{tpu_custom_call.1} parent=5 // pred_check
        %p725 = pneg %p724
      $region70: #{tpu_custom_call.1} parent=5 // pred_check_branch
        %727 = sbr.rel (%p725) target = $region72
      $region71: #{tpu_custom_call.1} parent=5 // pred_region
        %s728 = ssub.s32 %s21, 2
        // Predicated region
        $region73: #{tpu_custom_call.1} parent=71 // pred_check
          %p729 = pneg %p202
        $region74: #{tpu_custom_call.1} parent=71 // pred_check_branch
          %731 = sbr.rel (%p729) target = $region76
        $region75: #{tpu_custom_call.1} parent=71 // pred_region
          %s732 = sand.u32 %s187, 1
          %s733 = scalar_lea.sflag [#allocation4], %s732
          %s734 = sand.u32 %s187, 1
          %s735 = smul.addr %s734, 8
          %s736 = scalar_lea.vmem [#allocation10], %s735
          %737 = dma.done %s733, 128
        $region76: #{tpu_custom_call.1} parent=71 // pred_fallthru
          _
      $region72: #{tpu_custom_call.1} parent=5 // pred_fallthru
        _
    $region6: #{tpu_custom_call.1} parent=1 // loop_footer
      %s25 = sadd.s32 1, %s21
    $region7: #{tpu_custom_call.1} parent=1 // loop_footer_branch
      %20 = sbr.rel target = $region3
    $region8: #{tpu_custom_call.1} parent=1 // loop_exit
      _
    %738 = vsyncpa [#allocation3], 1
    %s739 = scalar_lea.sflag [#allocation3], 1
    %740 = vsyncpa %s739, 1
    %741 = vsyncpa [#allocation6], 1
    %742 = vsyncpa [#allocation9], 1
    %743 = vsyncpa [#allocation4], 1
    %s744 = scalar_lea.sflag [#allocation4], 1
    %745 = vsyncpa %s744, 1

</llo_original>
